<compile_context>
chip_gen: v7x
topology: tpu7x:2x2x1
jax: 0.10.0
libtpu: 0.0.40
codegen_flags: <defaults>
</compile_context>

<pallas_src>
import functools

import numpy as np
import jax
import jax.numpy as jnp
from jax.experimental import pallas as pl
from jax.experimental.pallas import tpu as pltpu


# --------------------------------------------------------------------------
# Generation-aware sizing helpers.
# --------------------------------------------------------------------------
def _sublane_multiple(itemsize):
    # 8 rows/vreg for 4-byte, 16 for 2-byte (bf16), 32 for 1-byte dtypes.
    return max(8, 32 // max(1, int(itemsize)))


def _vmem_budget_bytes():
    # Per-block budget for the streaming pass (double-buffered in + out).
    default = 8 * 1024 * 1024
    try:
        cap = int(pltpu.get_tpu_info().vmem_capacity_bytes)
    except Exception:
        return default                      # CPU / interpret / unknown chip
    # v7x (64 MiB physical): 8 MiB; v5e/v6e (128 MiB): 16 MiB; cap at 24 MiB.
    return int(min(max(cap // 8, default), 24 * 1024 * 1024))


def _pick_group(C, HW, itemsize, budget):
    """Channels per lane-group G so that G*HW is a multiple of 128 and >=512."""
    mult = _sublane_multiple(itemsize)
    best = 1
    for g in range(1, C + 1):
        if C % g:
            continue
        lanes = g * HW
        if lanes % 128:
            continue
        if lanes * itemsize * 4 * mult > budget:
            break                           # even a minimal tile would blow VMEM
        best = g
        if lanes >= 512:
            break
    return best


def _pick_tile_rows(N, R, L, itemsize, budget):
    """Channel-group rows per block: fits budget, sublane-packed, >=2 blocks on N==1."""
    mult = _sublane_multiple(itemsize)
    bytes_per_row = max(1, L * itemsize * 4)          # x in + out, double-buffered
    max_rows = max(mult, (budget // bytes_per_row // mult) * mult)
    if R <= max_rows:
        if N == 1 and R >= 2 * mult:
            # Split once so both v7x TensorCores get a block ('parallel' grid).
            half = -(-((R + 1) // 2) // mult) * mult
            return min(half, R)
        return R                                       # equals full dim -> legal block
    return max_rows


# --------------------------------------------------------------------------
# Pass 1: per-image DropBlock keep-mask (tiny, cold path), tiled over N.
# --------------------------------------------------------------------------
def _fmd_mask_kernel(gamma_ref, u_ref, m_ref, *, H, W, block_size):
    """gamma_ref: SMEM (1,) f32; u_ref: VMEM (Hp, Wp) f32 uniforms (padded size);
    m_ref: VMEM (H, W) f32 unscaled keep mask for one image."""
    p = block_size // 2
    Hp, Wp = H + 2 * p, W + 2 * p

    # Bernoulli seed mask at padded size; padded border zeroed with iota masks
    # (no jnp.pad, no unaligned ref stores).
    row = jax.lax.broadcasted_iota(jnp.int32, (Hp, Wp), 0)
    col = jax.lax.broadcasted_iota(jnp.int32, (Hp, Wp), 1)
    interior = (row >= p) & (row < p + H) & (col >= p) & (col < p + W)
    pm = ((u_ref[...] < gamma_ref[0]) & interior).astype(jnp.float32)

    # Separable dilation == max_pool2d(k=block_size, stride=1, 'same'):
    # 2*bs maxima instead of bs*bs.  Per-image data is a few KiB (cold path).
    pooled_w = pm[:, 0:W]
    for dx in range(1, block_size):
        pooled_w = jnp.maximum(pooled_w, pm[:, dx:dx + W])
    pooled = pooled_w[0:H, :]
    for dy in range(1, block_size):
        pooled = jnp.maximum(pooled, pooled_w[dy:dy + H, :])

    m_ref[...] = 1.0 - pooled                          # keep mask, unscaled


def fmd_make_block_mask(u_padded, gamma, *, N, H, W, block_size):
    """u_padded: (N, H+2p, W+2p) f32 uniforms.  Returns (N, H, W) f32 keep mask."""
    p = block_size // 2
    Hp, Wp = H + 2 * p, W + 2 * p
    kernel = functools.partial(_fmd_mask_kernel, H=H, W=W, block_size=block_size)
    gamma_arr = jnp.asarray([gamma], dtype=jnp.float32)
    return pl.pallas_call(
        kernel,
        out_shape=jax.ShapeDtypeStruct((N, H, W), jnp.float32),
        grid=(N,),
        in_specs=[
            pl.BlockSpec(memory_space=pltpu.MemorySpace.SMEM),
            pl.BlockSpec((None, Hp, Wp), lambda n: (n, 0, 0)),
        ],
        out_specs=pl.BlockSpec((None, H, W), lambda n: (n, 0, 0)),
        compiler_params=pltpu.CompilerParams(dimension_semantics=("parallel",)),
    )(gamma_arr, u_padded)


# --------------------------------------------------------------------------
# Pass 2: lane-dense streaming multiply (the hot path, HBM-bound).
# --------------------------------------------------------------------------
def _fmd_scale_kernel(x_ref, m_ref, o_ref):
    # x_ref/o_ref: (tile_r, L) lane-dense; m_ref: (1, L) pre-scaled f32 mask.
    # One broadcast VPU multiply per element; renorm scale already folded in.
    o_ref[...] = (x_ref[...] * m_ref[...]).astype(o_ref.dtype)


def fmd_apply_mask(x, scaled_mask):
    """x: (N, C, H, W); scaled_mask: (N, H, W) f32 pre-scaled keep mask."""
    N, C, H, W = x.shape
    HW = H * W
    itemsize = x.dtype.itemsize
    budget = _vmem_budget_bytes()

    # Group channels so the lane dim is a multiple of 128 (and >=512 lanes):
    # x viewed as (N, C//G, G*H*W); the per-row mask is the HW mask tiled G x.
    G = _pick_group(C, HW, itemsize, budget)
    R, L = C // G, G * HW
    xf = x.reshape(N, R, L)                               # metadata-only view
    m = scaled_mask.reshape(N, 1, HW).astype(jnp.float32)
    if G > 1:
        m = jnp.tile(m, (1, 1, G))                        # lane l = g*HW + s -> mask[s]

    tile_r = _pick_tile_rows(N, R, L, itemsize, budget)
    grid = (N, pl.cdiv(R, tile_r))
    cost = pl.CostEstimate(
        flops=N * C * HW,
        transcendentals=0,
        bytes_accessed=2 * N * C * HW * itemsize + N * HW * 4,
    )
    out = pl.pallas_call(
        _fmd_scale_kernel,
        out_shape=jax.ShapeDtypeStruct((N, R, L), x.dtype),
        grid=grid,
        in_specs=[
            pl.BlockSpec((None, tile_r, L), lambda n, c: (n, c, 0)),
            pl.BlockSpec((None, 1, L), lambda n, c: (n, 0, 0)),
        ],
        out_specs=pl.BlockSpec((None, tile_r, L), lambda n, c: (n, c, 0)),
        compiler_params=pltpu.CompilerParams(
            dimension_semantics=("parallel", "parallel"),
            vmem_limit_bytes=32 * 1024 * 1024,
        ),
        cost_estimate=cost,
    )(xf, m)
    return out.reshape(N, C, H, W)


# --------------------------------------------------------------------------
# Module ports.
# --------------------------------------------------------------------------
class FMDBlock:
    """DropBlock2D-style feature-map-distortion block; drop_prob set by scheduler."""

    def __init__(self, drop_prob=0.0, block_size=3, seed=0):
        self.drop_prob = float(drop_prob)
        self.block_size = int(block_size)
        self.training = True
        self._seed = int(seed)
        self._counter = 0                   # deterministic per-call RNG stream

    def __call__(self, x):
        if (not self.training) or self.drop_prob <= 0.0:
            return x
        N, C, H, W = x.shape
        bs = self.block_size
        p = bs // 2
        # Per-pixel seed probability so ~drop_prob of features are dropped.
        gamma = (self.drop_prob / (bs ** 2)) * (H * W) / max((H - bs + 1) * (W - bs + 1), 1)
        key = jax.random.fold_in(jax.random.PRNGKey(self._seed), self._counter)
        self._counter += 1
        # Tiny O(N*Hp*Wp) uniform draw on host/XLA (portable; no in-kernel PRNG).
        u = jax.random.uniform(key, (N, H + 2 * p, W + 2 * p), dtype=jnp.float32)

        block_mask = fmd_make_block_mask(u, gamma, N=N, H=H, W=W, block_size=bs)
        # Global renormalisation folded into the (tiny) mask once; f32 to keep
        # the rescale factor exact even for bf16 activations.
        total = jnp.float32(N * H * W)
        scale = total / jnp.maximum(jnp.sum(block_mask), 1.0)
        scaled_mask = block_mask * scale
        return fmd_apply_mask(x, scaled_mask)


class LinearScheduler:
    """Faithful port of the PyTorch LinearScheduler (forward delegates to fmdblock)."""

    def __init__(self, fmdblock, start_value, stop_value, nr_steps):
        self.fmdblock = fmdblock
        self.i = 0
        # Note: int() casts follow the original spec verbatim.
        self.dis_values = np.linspace(start=int(start_value),
                                      stop=int(stop_value),
                                      num=int(nr_steps))

    def forward(self, x):
        return self.fmdblock(x)

    def __call__(self, x):
        return self.forward(x)

    def step(self):
        if self.i < len(self.dis_values):
            self.fmdblock.drop_prob = float(self.dis_values[self.i])
        self.i += 1


if __name__ == "__main__":
    key = jax.random.PRNGKey(0)
    x = jax.random.normal(key, (2, 4, 16, 16), dtype=jnp.float32)

    fmd = FMDBlock(drop_prob=0.0, block_size=3, seed=0)
    sched = LinearScheduler(fmd, start_value=0, stop_value=1, nr_steps=5)

    # dis_values = [0, .25, .5, .75, 1.]; after 2 steps drop_prob == 0.25.
    sched.step()
    sched.step()

    out = jax.block_until_ready(sched(x))
    assert out.shape == x.shape and out.dtype == x.dtype
    assert bool(jnp.all(jnp.isfinite(out)))

    # Streaming-kernel numerical check: an all-keep mask (scale 1) reproduces x.
    N, C, H, W = x.shape
    ident = jax.block_until_ready(fmd_apply_mask(x, jnp.ones((N, H, W), jnp.float32)))
    assert bool(jnp.allclose(ident, x))

    # bf16 activations go through the same path (mask stays f32; dtype preserved).
    xb = x.astype(jnp.bfloat16)
    outb = jax.block_until_ready(fmd(xb))
    assert outb.shape == xb.shape and outb.dtype == xb.dtype

    # drop_prob == 0 (or eval) path is an identity passthrough, no kernel launch.
    fmd_zero = FMDBlock(drop_prob=0.0, block_size=3)
    assert fmd_zero(x) is x

    print("KERNEL_OK")
</pallas_src>

<mosaic_0001>
module attributes {stable_mosaic.version = 11 : i64} {
  func.func @_fmd_mask_kernel(%arg0: i32, %arg1: memref<1xf32, #tpu.memory_space<smem>>, %arg2: memref<1x18x18xf32, #tpu.memory_space<vmem>>, %arg3: memref<1x16x16xf32, #tpu.memory_space<vmem>>) attributes {dimension_semantics = [#tpu.dimension_semantics<parallel>], iteration_bounds = array<i64: 2>, scalar_prefetch = 0 : i64, scratch_operands = 0 : i64, tpu.core_type = #tpu.core_type<tc>, window_params = [{transform_indices = @transform_0, window_bounds = array<i64: 1>}, {transform_indices = @transform_1, window_bounds = array<i64: 1, 18, 18>}, {transform_indices = @transform_2, window_bounds = array<i64: 1, 16, 16>}]} {
    %0 = tpu.iota {dimensions = array<i32: 0>} : vector<18x18xi32>
    %1 = tpu.iota {dimensions = array<i32: 1>} : vector<18x18xi32>
    %c1_i32 = arith.constant 1 : i32
    %2 = vector.broadcast %c1_i32 : i32 to vector<18x18xi32>
    %3 = arith.cmpi sge, %0, %2 : vector<18x18xi32>
    %c17_i32 = arith.constant 17 : i32
    %4 = vector.broadcast %c17_i32 : i32 to vector<18x18xi32>
    %5 = arith.cmpi slt, %0, %4 : vector<18x18xi32>
    %6 = arith.andi %3, %5 : vector<18x18xi1>
    %c1_i32_0 = arith.constant 1 : i32
    %7 = vector.broadcast %c1_i32_0 : i32 to vector<18x18xi32>
    %8 = arith.cmpi sge, %1, %7 : vector<18x18xi32>
    %9 = arith.andi %6, %8 : vector<18x18xi1>
    %c17_i32_1 = arith.constant 17 : i32
    %10 = vector.broadcast %c17_i32_1 : i32 to vector<18x18xi32>
    %11 = arith.cmpi slt, %1, %10 : vector<18x18xi32>
    %12 = arith.andi %9, %11 : vector<18x18xi1>
    %c0 = arith.constant 0 : index
    %c0_2 = arith.constant 0 : index
    %c0_3 = arith.constant 0 : index
    %13 = vector.load %arg2[%c0, %c0_2, %c0_3] : memref<1x18x18xf32, #tpu.memory_space<vmem>>, vector<1x18x18xf32>
    %14 = vector.shape_cast %13 : vector<1x18x18xf32> to vector<18x18xf32>
    %c0_4 = arith.constant 0 : index
    %15 = memref.load %arg1[%c0_4] : memref<1xf32, #tpu.memory_space<smem>>
    %16 = vector.broadcast %15 : f32 to vector<18x18xf32>
    %17 = arith.cmpf olt, %14, %16 : vector<18x18xf32>
    %18 = arith.andi %17, %12 : vector<18x18xi1>
    %19 = arith.extui %18 : vector<18x18xi1> to vector<18x18xi32>
    %20 = arith.sitofp %19 : vector<18x18xi32> to vector<18x18xf32>
    %21 = vector.extract_strided_slice %20 {offsets = [0, 0], sizes = [18, 16], strides = [1, 1]} : vector<18x18xf32> to vector<18x16xf32>
    %22 = vector.extract_strided_slice %20 {offsets = [0, 1], sizes = [18, 16], strides = [1, 1]} : vector<18x18xf32> to vector<18x16xf32>
    %23 = arith.maximumf %21, %22 : vector<18x16xf32>
    %24 = vector.extract_strided_slice %20 {offsets = [0, 2], sizes = [18, 16], strides = [1, 1]} : vector<18x18xf32> to vector<18x16xf32>
    %25 = arith.maximumf %23, %24 : vector<18x16xf32>
    %26 = vector.extract_strided_slice %25 {offsets = [0, 0], sizes = [16, 16], strides = [1, 1]} : vector<18x16xf32> to vector<16x16xf32>
    %27 = vector.extract_strided_slice %25 {offsets = [1, 0], sizes = [16, 16], strides = [1, 1]} : vector<18x16xf32> to vector<16x16xf32>
    %28 = arith.maximumf %26, %27 : vector<16x16xf32>
    %29 = vector.extract_strided_slice %25 {offsets = [2, 0], sizes = [16, 16], strides = [1, 1]} : vector<18x16xf32> to vector<16x16xf32>
    %30 = arith.maximumf %28, %29 : vector<16x16xf32>
    %cst = arith.constant 1.000000e+00 : f32
    %31 = vector.broadcast %cst : f32 to vector<16x16xf32>
    %32 = arith.subf %31, %30 : vector<16x16xf32>
    %c0_5 = arith.constant 0 : index
    %c0_6 = arith.constant 0 : index
    %c0_7 = arith.constant 0 : index
    %33 = vector.load %arg3[%c0_5, %c0_6, %c0_7] : memref<1x16x16xf32, #tpu.memory_space<vmem>>, vector<1x16x16xf32>
    %34 = vector.shape_cast %33 : vector<1x16x16xf32> to vector<16x16xf32>
    %35 = vector.shape_cast %32 : vector<16x16xf32> to vector<1x16x16xf32>
    tpu.vector_store %arg3[%c0_5, %c0_6, %c0_7], %35 {strides = array<i32>} : memref<1x16x16xf32, #tpu.memory_space<vmem>>, vector<1x16x16xf32>,
    return
  }
  func.func @transform_0(%arg0: i32) -> i32 {
    %c0_i32 = arith.constant 0 : i32
    %c0_i32_0 = arith.constant 0 : i32
    return %c0_i32 : i32
  }
  func.func @transform_1(%arg0: i32) -> (i32, i32, i32) {
    %c0_i32 = arith.constant 0 : i32
    %c0_i32_0 = arith.constant 0 : i32
    %c0_i32_1 = arith.constant 0 : i32
    return %arg0, %c0_i32, %c0_i32_0 : i32, i32, i32
  }
  func.func @transform_2(%arg0: i32) -> (i32, i32, i32) {
    %c0_i32 = arith.constant 0 : i32
    %c0_i32_0 = arith.constant 0 : i32
    %c0_i32_1 = arith.constant 0 : i32
    return %arg0, %c0_i32, %c0_i32_0 : i32, i32, i32
  }
}

</mosaic_0001>

<llo_original>
// kernel: tpu_custom_call.1
$region0: #{tpu_custom_call.1}
  #allocation0 [shape = 'u32[]', space=smem, size = 0x4, offset = 0x4, fixed_abs, tag = 'smem constant byte address 0x4 - core index']
  #allocation1 [shape = 'u32[144,128]{1,0:T(1,128)}', space=vmem, size = 0x12000, scoped, tag = 'internal scratch']
  #allocation2 [shape = 'f32[1]{0:T(128)S(6)}', space=smem, size = 0x200, scoped, tag = 'scoped memory for tpu_custom_call.1']
  %s0 = inlined_call_operand.<no memory space> [shape: f32[1], index: 0, kind: input, shape index: {}]
  %s1 = inlined_call_operand.vmem [shape: f32[2,18,18], index: 1, kind: input, shape index: {}]
  %s2 = inlined_call_operand.hbm [shape: f32[2,16,16], index: 2, kind: output, shape index: {}]
  %s3 = sld [smem:[#allocation0]]
  $region41: #{tpu_custom_call.1} parent=0
    _
  %s5 = ssub.s32 1, %s3
  %s6 = scalar_select 0, %s5, %s3
  %7 = sst [smem:[#allocation2]] %s0
  $region1: #{tpu_custom_call.1} parent=0
    #allocation3 [shape = 'u8[16384]{0}', space=vmem, size = 0x4000, scoped, tag = 'output window, operand 0']
    #allocation4 [shape = 's32[2]{0}', space=sflag, size = 0x8, scoped, tag = 'scoped memory for tpu_custom_call.1']
    %8 = vsyncpa [#allocation4], 0
    %s9 = scalar_lea.sflag [#allocation4], 1
    %10 = vsyncpa %s9, 0
    loop: start=0, step=1, limit=4
    $region2: #{tpu_custom_call.1} parent=1 // loop_pre_header
      _
    $region3: #{tpu_custom_call.1} parent=1 // loop_header
      %s12 = sphi 0, %s16
      %p13 = scmp.ge.s32.totalorder %s12, 4
      %s20 = sphi 0, %s20
      %s22 = sphi 0, %s20
      %s23 = sphi 0, %s22
      %s37 = sphi 0, %s23
      %s43 = sphi 0, %s45
      %s46 = sphi 0, %s43
      %s47 = sphi 0, %s46
      %s63 = sphi 0, %s47
      %s69 = sphi 0, %s71
      %s72 = sphi 0, %s69
      %s73 = sphi 0, %s72
      %s89 = sphi 0, %s73
    $region4: #{tpu_custom_call.1} parent=1 // loop_header_branch
      %15 = sbr.rel (%p13) target = $region8
    $region5: #{tpu_custom_call.1} parent=1 // loop_body
      %s17 = ssub.s32 %s12, 1
      %s18 = ssub.s32 %s12, 2
      %s19 = sadd.s32 %s12, 1
      %s21 = sadd.s32 %s20, 1
      %p24 = scmp.eq.s32.totalorder %s12, 1
      %p25 = scmp.ne.s32.totalorder %s20, %s22
      %p26 = scmp.eq.s32.totalorder %s12, 0
      %p27 = por %p25, %p26
      %p28 = scmp.ne.s32.totalorder %s20, %s22
      %p29 = scmp.eq.s32.totalorder %s17, 1
      %p30 = por %p28, %p29
      %p31 = scmp.ne.s32.totalorder %s22, %s23
      %p32 = scmp.eq.s32.totalorder %s17, 0
      %p33 = por %p31, %p32
      %p34 = scmp.ne.s32.totalorder %s22, %s23
      %p35 = scmp.eq.s32.totalorder %s18, 1
      %p36 = por %p34, %p35
      %p38 = scmp.ne.s32.totalorder %s23, %s37
      %p39 = scmp.eq.s32.totalorder %s18, 0
      %p40 = por %p38, %p39
      %s41 = ssub.s32 %s12, %s19
      %p42 = scmp.eq.s32.totalorder %s41, 0
      %s44 = sadd.s32 %s43, 1
      %s45 = scalar_select %p42, %s43, %s44
      %p48 = pneg %p42
      %p49 = scmp.eq.s32.totalorder %s12, 1
      %p50 = por %p48, %p49
      %p51 = scmp.ne.s32.totalorder %s43, %s46
      %p52 = scmp.eq.s32.totalorder %s12, 0
      %p53 = por %p51, %p52
      %p54 = scmp.ne.s32.totalorder %s43, %s46
      %p55 = scmp.eq.s32.totalorder %s17, 1
      %p56 = por %p54, %p55
      %p57 = scmp.ne.s32.totalorder %s46, %s47
      %p58 = scmp.eq.s32.totalorder %s17, 0
      %p59 = por %p57, %p58
      %p60 = scmp.ne.s32.totalorder %s46, %s47
      %p61 = scmp.eq.s32.totalorder %s18, 1
      %p62 = por %p60, %p61
      %p64 = scmp.ne.s32.totalorder %s47, %s63
      %p65 = scmp.eq.s32.totalorder %s18, 0
      %p66 = por %p64, %p65
      %s67 = ssub.s32 %s12, %s19
      %p68 = scmp.eq.s32.totalorder %s67, 0
      %s70 = sadd.s32 %s69, 1
      %s71 = scalar_select %p68, %s69, %s70
      %p74 = pneg %p68
      %p75 = scmp.eq.s32.totalorder %s12, 1
      %p76 = por %p74, %p75
      %p77 = scmp.ne.s32.totalorder %s69, %s72
      %p78 = scmp.eq.s32.totalorder %s12, 0
      %p79 = por %p77, %p78
      %p80 = scmp.ne.s32.totalorder %s69, %s72
      %p81 = scmp.eq.s32.totalorder %s17, 1
      %p82 = por %p80, %p81
      %p83 = scmp.ne.s32.totalorder %s72, %s73
      %p84 = scmp.eq.s32.totalorder %s17, 0
      %p85 = por %p83, %p84
      %p86 = scmp.ne.s32.totalorder %s72, %s73
      %p87 = scmp.eq.s32.totalorder %s18, 1
      %p88 = por %p86, %p87
      %p90 = scmp.ne.s32.totalorder %s73, %s89
      %p91 = scmp.eq.s32.totalorder %s18, 0
      %p92 = por %p90, %p91
      %p93 = scmp.le.s32.totalorder 1, %s12
      %p94 = scmp.lt.s32.totalorder %s12, 3
      %p95 = pnand %p93, %p94
      %p96 = pneg %p95
      // Predicated region
      $region9: #{tpu_custom_call.1} parent=5 // pred_check
        _
      $region10: #{tpu_custom_call.1} parent=5 // pred_check_branch
        %98 = sbr.rel (%p95) target = $region12
      $region11: #{tpu_custom_call.1} parent=5 // pred_region
        %s99 = ssub.s32 %s12, 1
        // Predicated region
        $region13: #{tpu_custom_call.1} parent=11 // pred_check
          %p100 = pneg %p33
        $region14: #{tpu_custom_call.1} parent=11 // pred_check_branch
          %102 = sbr.rel (%p100) target = $region16
        $region15: #{tpu_custom_call.1} parent=11 // pred_region
          _
        $region16: #{tpu_custom_call.1} parent=11 // pred_fallthru
          _
      $region12: #{tpu_custom_call.1} parent=5 // pred_fallthru
        _
      %p103 = scmp.lt.s32.totalorder %s12, 2
      // Predicated region
      $region17: #{tpu_custom_call.1} parent=5 // pred_check
        %p104 = pneg %p103
      $region18: #{tpu_custom_call.1} parent=5 // pred_check_branch
        %106 = sbr.rel (%p104) target = $region20
      $region19: #{tpu_custom_call.1} parent=5 // pred_region
        // Predicated region
        $region21: #{tpu_custom_call.1} parent=19 // pred_check
          %p107 = pneg %p53
        $region22: #{tpu_custom_call.1} parent=19 // pred_check_branch
          %109 = sbr.rel (%p107) target = $region24
        $region23: #{tpu_custom_call.1} parent=19 // pred_region
          %p110 = scmp.lt.s32.totalorder %s12, 1
          %s111 = scalar_select %p110, %s12, 1
          %s112 = smul.addr %s111, 3
          %s113 = smul.addr %s112, 8
          %s114 = scalar_lea.vmem %s1, %s113
        $region24: #{tpu_custom_call.1} parent=19 // pred_fallthru
          _
      $region20: #{tpu_custom_call.1} parent=5 // pred_fallthru
        _
      %p115 = scmp.le.s32.totalorder 1, %s12
      %p116 = scmp.lt.s32.totalorder %s12, 3
      %p117 = pnand %p115, %p116
      %p118 = pneg %p117
      // Predicated region
      $region25: #{tpu_custom_call.1} parent=5 // pred_check
        _
      $region26: #{tpu_custom_call.1} parent=5 // pred_check_branch
        %120 = sbr.rel (%p117) target = $region28
      $region27: #{tpu_custom_call.1} parent=5 // pred_region
        %s121 = ssub.s32 %s12, 1
        %p122 = pneg %p33
        %p123 = pneg %p30
        %p124 = scmp.lt.s32.totalorder %s17, 1
        %s125 = scalar_select %p124, %s17, 1
        %s126 = smul.addr %s125, 3
        %s127 = smul.addr %s126, 8
        %s128 = scalar_lea.vmem %s1, %s127
        %p129 = pneg %p59
        %p130 = pneg %p56
        %p131 = pneg %p85
        %p132 = pneg %p82
        %s133 = sand.u32 %s72, 1
        %s134 = scalar_lea.sflag [#allocation4], %s133
        %s135 = sand.u32 %s72, 1
        %s136 = smul.addr %s135, 16
        %s137 = scalar_lea.vmem [#allocation3], %s136
        %p138 = scmp.lt.s32.totalorder %s17, 1
        %s139 = scalar_select %p138, %s17, 1
        %s140 = smul.addr %s139, 3
        %s141 = smul.addr %s140, 8
        %s142 = scalar_lea.vmem %s1, %s141
        %v143 = vlaneseq
        %v144 = vshrl.u32 %v143, 7
        %v145 = vadd.s32 %v144, 8
        %v146 = vadd.s32 %v144, 16
        %v147 = vlaneseq
        %v148 = vand.u32 %v147, 127
        %vm149 = vcmp.ge.s32.totalorder %v144, 1
        %vm150 = vcmp.ge.s32.totalorder %v145, 1
        %vm151 = vcmp.ge.s32.totalorder %v146, 1
        %vm152 = vcmp.lt.s32.totalorder %v144, 17
        %vm153 = vcmp.lt.s32.totalorder %v145, 17
        %vm154 = vcmp.lt.s32.totalorder %v146, 17
        %vm155 = vmand %vm149, %vm152
        %vm156 = vmand %vm150, %vm153
        %vm157 = vmand %vm151, %vm154
        %vm158 = vcmp.ge.s32.totalorder %v148, 1
        %vm159 = vmand %vm155, %vm158
        %vm160 = vmand %vm156, %vm158
        %vm161 = vmand %vm157, %vm158
        %vm162 = vcmp.lt.s32.totalorder %v148, 17
        %vm163 = vmand %vm159, %vm162
        %vm164 = vmand %vm160, %vm162
        %vm165 = vmand %vm161, %vm162
        %v166 = vld [vmem:[%s142] sm:$0xff]
        %v167 = vld [vmem:[%s142 + $0x8] sm:$0xff]
        %v168 = vld [vmem:[%s142 + $0x10] sm:$0x3]
        %s169 = sld [smem:[#allocation2]]
        %v170 = vstv %s169
        %vm171 = vcmp.lt.f32.partialorder %v166, %v170
        %vm172 = vcmp.lt.f32.partialorder %v167, %v170
        %vm173 = vcmp.lt.f32.partialorder %v168, %v170
        %vm174 = vmand %vm171, %vm163
        %vm175 = vmand %vm172, %vm164
        %vm176 = vmand %vm173, %vm165
        %v177 = vsel %vm174, 1, 0
        %v178 = vsel %vm175, 1, 0
        %v179 = vsel %vm176, 1, 0
        %v180 = vcvt.s32.f32 %v177
        %v181 = vcvt.s32.f32 %v178
        %v182 = vcvt.s32.f32 %v179
        %186 = vrot.lane.b32.xlu0 %v180, 127
        %v187 = vpop.permute.xlu0 %186
        %188 = vrot.lane.b32.xlu0 %v181, 127
        %v189 = vpop.permute.xlu0 %188
        %190 = vrot.lane.b32.xlu0 %v182, 127
        %v191 = vpop.permute.xlu0 %190
        %v195 = vmax.f32 %v180, %v187
        %v196 = vmax.f32 %v181, %v189
        %v197 = vmax.f32 %v182, %v191
        %198 = vrot.lane.b32.xlu0 %v180, 126
        %v199 = vpop.permute.xlu0 %198
        %200 = vrot.lane.b32.xlu0 %v181, 126
        %v201 = vpop.permute.xlu0 %200
        %202 = vrot.lane.b32.xlu0 %v182, 126
        %v203 = vpop.permute.xlu0 %202
        %v207 = vmax.f32 %v195, %v199
        %v208 = vmax.f32 %v196, %v201
        %v209 = vmax.f32 %v197, %v203
        %vm213 = vcmask 1046528
        %v214 = vrot.slane %v207, 1
        %v215 = vrot.slane %v208, 1
        %v216 = vsel %vm213, %v214, %v215
        %v217 = vrot.slane %v209, 1
        %v218 = vsel %vm213, %v215, %v217
        %v221 = vmax.f32 %v207, %v216
        %v222 = vmax.f32 %v208, %v218
        %vm223 = vcmask 1045504
        %v224 = vrot.slane %v207, 2
        %v225 = vrot.slane %v208, 2
        %v226 = vsel %vm223, %v224, %v225
        %v227 = vrot.slane %v209, 2
        %v228 = vsel %vm223, %v225, %v227
        %v231 = vmax.f32 %v221, %v226
        %v232 = vmax.f32 %v222, %v228
        %v233 = vsub.f32 1.0, %v231
        %v234 = vsub.f32 1.0, %v232
        %vm235 = vcmask 130048
        %236 = vst.msk [vmem:[%s137] sm:$0xff] %vm235, %v233
        %237 = vst.msk [vmem:[%s137 + $0x8] sm:$0xff] %vm235, %v234
        %s238 = sand.u32 %s72, 1
        %s239 = scalar_lea.sflag [#allocation4], %s238
        %s240 = sand.u32 %s72, 1
        %s241 = smul.addr %s240, 16
        %s242 = scalar_lea.vmem [#allocation3], %s241
        // Predicated region
        $region29: #{tpu_custom_call.1} parent=27 // pred_check
          %p243 = pneg %p82
        $region30: #{tpu_custom_call.1} parent=27 // pred_check_branch
          %245 = sbr.rel (%p243) target = $region32
        $region31: #{tpu_custom_call.1} parent=27 // pred_region
          %s247 = ssub.s32 256, 256
          %248 = vsyncadd %s239, %s247
          %s249 = smul.addr %s17, 2
          %s250 = smul.addr %s249, 128
          %s251 = scalar_lea.hbm %s2, %s250
          %s252 = sshll.u32 %s242, 4
          %s253 = int_to_ptr.vmem [resolvable:$true] %s252
          %258 = dma.vmem_to_hbm [thread:$0]  %s253, 256, %s251, %s239, 128, 128, 8
        $region32: #{tpu_custom_call.1} parent=27 // pred_fallthru
          _
      $region28: #{tpu_custom_call.1} parent=5 // pred_fallthru
        _
      %p259 = scmp.le.s32.totalorder 2, %s12
      // Predicated region
      $region33: #{tpu_custom_call.1} parent=5 // pred_check
        %p260 = pneg %p259
      $region34: #{tpu_custom_call.1} parent=5 // pred_check_branch
        %262 = sbr.rel (%p260) target = $region36
      $region35: #{tpu_custom_call.1} parent=5 // pred_region
        %s263 = ssub.s32 %s12, 2
        // Predicated region
        $region37: #{tpu_custom_call.1} parent=35 // pred_check
          %p264 = pneg %p88
        $region38: #{tpu_custom_call.1} parent=35 // pred_check_branch
          %266 = sbr.rel (%p264) target = $region40
        $region39: #{tpu_custom_call.1} parent=35 // pred_region
          %s267 = sand.u32 %s73, 1
          %s268 = scalar_lea.sflag [#allocation4], %s267
          %s269 = sand.u32 %s73, 1
          %s270 = smul.addr %s269, 16
          %s271 = scalar_lea.vmem [#allocation3], %s270
          %272 = dma.done %s268, 256
        $region40: #{tpu_custom_call.1} parent=35 // pred_fallthru
          _
      $region36: #{tpu_custom_call.1} parent=5 // pred_fallthru
        _
    $region6: #{tpu_custom_call.1} parent=1 // loop_footer
      %s16 = sadd.s32 1, %s12
    $region7: #{tpu_custom_call.1} parent=1 // loop_footer_branch
      %11 = sbr.rel target = $region3
    $region8: #{tpu_custom_call.1} parent=1 // loop_exit
      _
    %273 = vsyncpa [#allocation4], 1
    %s274 = scalar_lea.sflag [#allocation4], 1
    %275 = vsyncpa %s274, 1

</llo_original>
